<compile_context>
chip_gen: v7x
topology: tpu7x:2x2x1
jax: 0.10.0
libtpu: 0.0.40
codegen_flags: <defaults>
</compile_context>

<pallas_src>
import jax
import jax.numpy as jnp
import numpy as np
from jax.experimental import pallas as pl
from jax.experimental.pallas import tpu as pltpu


# Stem "conv3d": kernel == stride (non-overlapping patches).
KT, KH, KW = 2, 4, 4
C_IN = 3
K_IN = C_IN * KT * KH * KW   # 96 — contraction dim; NOT padded on the HBM path
C_OUT = 32                   # logical output channels
N_PAD = 128                  # lane-dense feature width; cols >= C_OUT are zero
                             # and (with the fused head) never leave VMEM


def _round_up(x, m):
    return (x + m - 1) // m * m


def _pick_row_tile(p):
    # Big row tiles (<=1024) amortize the ~0.35us/grid-step overhead and keep
    # the HBM-bound stem near its roofline; cross-TC parallelism on v7x comes
    # from the batch grid axis, so a single row tile per batch is fine on
    # 1-TC chips.  At tm=1024: two bf16 patch tiles (2 x 192 KiB, double-
    # buffered) + f32 intermediates ~= 3 MiB << 16 MiB v5e scoped-VMEM default.
    return min(1024, _round_up(p, 8))


# ---------------------------------------------------------------------------
# Fused Pallas kernel: stem matmul + bias + ReLU for BOTH branches of one
# patch-row tile, per-batch correlation accumulation, size-1 softmax finalize.
#   s/r patches (bf16) [B, P_pad, K_IN],  W (bf16) [K_IN, N_PAD],
#   bias (f32) [1, N_PAD]  ->  match slab [B, 8, 128], score slab [B, 8, 128]
# ---------------------------------------------------------------------------
def _make_fused_kernel(*, tm, n_tiles, p_valid, p_pad):
    mask_tail = p_pad != p_valid

    def kernel(s_ref, r_ref, w_ref, b_ref, match_ref, score_ref, acc_ref):
        i = pl.program_id(1)                 # row-tile index (reduction axis)

        @pl.when(i == 0)
        def _init():
            acc_ref[...] = jnp.zeros_like(acc_ref)

        w = w_ref[...]                       # (K, N) bf16, grid-invariant (resident)
        bias = b_ref[...]                    # (1, N) f32
        xs = s_ref[0]                        # (tm, K) bf16
        xr = r_ref[0]

        # bf16 MXU matmuls, f32 accumulate, f32 bias+ReLU epilogue (v5e has no
        # bf16 VPU).  Features live only in VMEM/vregs.
        sf = jnp.maximum(
            jnp.dot(xs, w, preferred_element_type=jnp.float32) + bias, 0.0)
        rf = jnp.maximum(
            jnp.dot(xr, w, preferred_element_type=jnp.float32) + bias, 0.0)
        prod = sf * rf

        if mask_tail:
            # Zero-padded tail rows have features relu(bias) != 0 -> mask them
            # out of the correlation.
            rows = i * tm + jax.lax.broadcasted_iota(jnp.int32, prod.shape, 0)
            prod = jnp.where(rows < p_valid, prod, 0.0)

        # Sublane-reduce per tile; the single cross-lane reduce happens once in
        # the finalize branch (keeps the XLU reduce off the hot loop).
        acc_ref[...] += jnp.sum(prod, axis=0, keepdims=True)

        @pl.when(i == n_tiles - 1)
        def _finalize():
            score = jnp.sum(acc_ref[...], axis=-1, keepdims=True)     # (1, 1)
            # Softmax over the module's size-1 class axis (identically 1.0);
            # the stable formula is evaluated only here, off the hot loop.
            e = jnp.exp(score - score)
            sm = e / jnp.sum(e, axis=-1, keepdims=True)
            match_ref[0] = jnp.broadcast_to(sm, match_ref.shape[1:]).astype(
                match_ref.dtype)
            score_ref[0] = jnp.broadcast_to(score, score_ref.shape[1:]).astype(
                score_ref.dtype)

    return kernel


def fused_stem_match(s_patches, r_patches, w, b, *, row_tile=None):
    B, P, K = s_patches.shape
    N = w.shape[1]

    tm = _pick_row_tile(P) if row_tile is None else _round_up(row_tile, 8)
    tm = min(tm, _round_up(P, 8))
    n_tiles = pl.cdiv(P, tm)
    p_pad = n_tiles * tm
    if p_pad != P:
        pad = ((0, 0), (0, p_pad - P), (0, 0))
        s_patches = jnp.pad(s_patches, pad)
        r_patches = jnp.pad(r_patches, pad)

    kernel = _make_fused_kernel(tm=tm, n_tiles=n_tiles, p_valid=P, p_pad=p_pad)
    cost = pl.CostEstimate(
        flops=2 * 2 * B * p_pad * K * N,
        transcendentals=B,
        bytes_accessed=(2 * B * p_pad * K * 2) + (K * N * 2) + (N * 4)
        + 2 * B * 8 * 128 * 4,
    )

    match_slab, score_slab = pl.pallas_call(
        kernel,
        out_shape=(
            jax.ShapeDtypeStruct((B, 8, 128), jnp.float32),   # softmax slab
            jax.ShapeDtypeStruct((B, 8, 128), jnp.float32),   # raw-score slab
        ),
        grid=(B, n_tiles),
        in_specs=[
            pl.BlockSpec((1, tm, K), lambda bb, i: (bb, i, 0)),
            pl.BlockSpec((1, tm, K), lambda bb, i: (bb, i, 0)),
            pl.BlockSpec((K, N), lambda bb, i: (0, 0)),
            pl.BlockSpec((1, N), lambda bb, i: (0, 0)),
        ],
        out_specs=(
            pl.BlockSpec((1, 8, 128), lambda bb, i: (bb, 0, 0)),
            pl.BlockSpec((1, 8, 128), lambda bb, i: (bb, 0, 0)),
        ),
        scratch_shapes=[pltpu.VMEM((1, N), jnp.float32)],
        compiler_params=pltpu.CompilerParams(
            dimension_semantics=("parallel", "arbitrary"),
        ),
        cost_estimate=cost,
    )(s_patches, r_patches, w.astype(jnp.bfloat16), b)
    return match_slab, score_slab


# ---------------------------------------------------------------------------
# im2col + forward
# ---------------------------------------------------------------------------
def _im2col_patches(videos):
    """[B, T, C, H, W] -> bf16 patch tensor [B, P, K_IN].

    Folds PyTorch's .permute(0, 2, 1, 3, 4) (to NCDHW) and the kernel==stride
    im2col into one relayout; the patch-feature ordering only needs to be
    consistent with the weight layout.
    TODO(synk): this relayout is still materialized by XLA (one HBM round trip
    of the activations); folding the patch walk into the kernel via a BlockSpec
    index_map over (Tt,Hh,Ww) / manual DMA gather is the remaining big lever.
    """
    x = videos.astype(jnp.bfloat16)
    B, T, C, H, W = x.shape
    Tt, Hh, Ww = T // KT, H // KH, W // KW
    x = x.reshape(B, Tt, KT, C, Hh, KH, Ww, KW)
    x = jnp.transpose(x, (0, 1, 4, 6, 3, 2, 5, 7))   # [B,Tt,Hh,Ww,C,KT,KH,KW]
    return x.reshape(B, Tt * Hh * Ww, K_IN)


def siamese_scores_and_match(search_videos, ref_videos, params, row_tile=None):
    # TODO(synk): stand-in for the pretrained ResNet18-3D backbone
    # (generate_model(18) + checkpoint); real weights are not reproducible
    # in-script.
    s_patches = _im2col_patches(search_videos)        # (B, P, K_IN) bf16
    r_patches = _im2col_patches(ref_videos)
    match_slab, score_slab = fused_stem_match(
        s_patches, r_patches, params["w"], params["b"], row_tile=row_tile)
    return match_slab[:, 0, :1], score_slab[:, 0, :1]  # (B, 1) each


def siamese_cnn3d_forward(search_videos, ref_videos, params):
    return siamese_scores_and_match(search_videos, ref_videos, params)[0]


def make_params(key):
    """Stem weights: cols >= C_OUT of W / bias are zero, so padded feature
    lanes are ReLU(0)=0 and contribute nothing to the correlation."""
    k_w, k_b = jax.random.split(key)
    w = jnp.zeros((K_IN, N_PAD), jnp.float32)
    b = jnp.zeros((1, N_PAD), jnp.float32)
    w = w.at[:, :C_OUT].set(
        jax.random.normal(k_w, (K_IN, C_OUT), jnp.float32) * 0.05)
    b = b.at[:, :C_OUT].set(
        jax.random.normal(k_b, (1, C_OUT), jnp.float32) * 0.01)
    return {"w": w, "b": b}


def _reference_forward(search_videos, ref_videos, params):
    """Plain-JAX reference using the same bf16-MXU / f32-accumulate path."""
    w_bf16 = params["w"].astype(jnp.bfloat16)

    def feats(v):
        p = _im2col_patches(v)                                    # (B,P,K) bf16
        a = jnp.einsum("bpk,kn->bpn", p, w_bf16,
                       preferred_element_type=jnp.float32) + params["b"]
        return jnp.maximum(a, 0.0)

    sf, rf = feats(search_videos), feats(ref_videos)
    scores = jnp.sum(sf * rf, axis=(1, 2))[:, None]               # (B, 1)
    return jax.nn.softmax(scores, axis=1), scores


# ---------------------------------------------------------------------------
if __name__ == "__main__":
    key = jax.random.PRNGKey(0)
    k1, k2, k3 = jax.random.split(key, 3)

    B, T, C, H, W = 2, 8, C_IN, 16, 16
    search_videos = jax.random.normal(k1, (B, T, C, H, W), jnp.float32)
    ref_videos = jax.random.normal(k2, (B, T, C, H, W), jnp.float32)
    params = make_params(k3)

    fwd = jax.jit(siamese_cnn3d_forward)
    out = jax.block_until_ready(fwd(search_videos, ref_videos, params))
    assert out.shape == (B, 1), out.shape

    # The module's softmax is over a size-1 axis, so the end-to-end output is
    # identically 1.0; the real numerical validation is the raw correlation
    # scores exported as the kernel's debug output.
    match, scores = jax.jit(siamese_scores_and_match)(
        search_videos, ref_videos, params)
    match, scores = jax.block_until_ready((match, scores))
    ref_match, ref_scores = _reference_forward(search_videos, ref_videos, params)

    np.testing.assert_allclose(np.asarray(out), np.asarray(ref_match),
                               rtol=1e-6, atol=1e-6)
    np.testing.assert_allclose(np.asarray(match), np.asarray(ref_match),
                               rtol=1e-6, atol=1e-6)
    np.testing.assert_allclose(np.asarray(scores), np.asarray(ref_scores),
                               rtol=2e-2, atol=1e-2)

    # Exercise the multi-tile accumulation + ragged-tail masking path
    # (tile=24 does not divide P=64 -> zero-padded, in-kernel-masked tail).
    _, scores_tiled = siamese_scores_and_match(
        search_videos, ref_videos, params, row_tile=24)
    scores_tiled = jax.block_until_ready(scores_tiled)
    np.testing.assert_allclose(np.asarray(scores_tiled), np.asarray(ref_scores),
                               rtol=2e-2, atol=1e-2)

    print("KERNEL_OK")
</pallas_src>

<mosaic_0001>
module attributes {stable_mosaic.version = 11 : i64} {
  func.func @kernel(%arg0: i32, %arg1: i32, %arg2: memref<1x64x96xbf16, #tpu.memory_space<vmem>>, %arg3: memref<1x64x96xbf16, #tpu.memory_space<vmem>>, %arg4: memref<96x128xbf16, #tpu.memory_space<vmem>>, %arg5: memref<1x128xf32, #tpu.memory_space<vmem>>, %arg6: memref<1x8x128xf32, #tpu.memory_space<vmem>>, %arg7: memref<1x8x128xf32, #tpu.memory_space<vmem>>, %arg8: memref<1x128xf32, #tpu.memory_space<vmem>>) attributes {dimension_semantics = [#tpu.dimension_semantics<parallel>, #tpu.dimension_semantics<arbitrary>], iteration_bounds = array<i64: 2, 1>, scalar_prefetch = 0 : i64, scratch_operands = 1 : i64, tpu.core_type = #tpu.core_type<tc>, window_params = [{transform_indices = @transform_0, window_bounds = array<i64: 1, 64, 96>}, {transform_indices = @transform_1, window_bounds = array<i64: 1, 64, 96>}, {pipeline_mode = #tpu.pipeline_mode<synchronous>, transform_indices = @transform_2, window_bounds = array<i64: 96, 128>}, {pipeline_mode = #tpu.pipeline_mode<synchronous>, transform_indices = @transform_3, window_bounds = array<i64: 1, 128>}, {transform_indices = @transform_4, window_bounds = array<i64: 1, 8, 128>}, {transform_indices = @transform_5, window_bounds = array<i64: 1, 8, 128>}]} {
    %c0_i32 = arith.constant 0 : i32
    %0 = arith.cmpi eq, %arg1, %c0_i32 : i32
    %1 = arith.extui %0 : i1 to i32
    %c0_i32_0 = arith.constant 0 : i32
    %2 = arith.cmpi ne, %1, %c0_i32_0 : i32
    scf.if %2 {
      %cst_20 = arith.constant 0.000000e+00 : f32
      %28 = vector.broadcast %cst_20 : f32 to vector<1x128xf32>
      %c0_21 = arith.constant 0 : index
      %c0_22 = arith.constant 0 : index
      %29 = vector.load %arg8[%c0_21, %c0_22] : memref<1x128xf32, #tpu.memory_space<vmem>>, vector<1x128xf32>
      tpu.vector_store %arg8[%c0_21, %c0_22], %28 {strides = array<i32>} : memref<1x128xf32, #tpu.memory_space<vmem>>, vector<1x128xf32>,
    } else {
    }
    %c0 = arith.constant 0 : index
    %c0_1 = arith.constant 0 : index
    %3 = vector.load %arg4[%c0, %c0_1] : memref<96x128xbf16, #tpu.memory_space<vmem>>, vector<96x128xbf16>
    %c0_2 = arith.constant 0 : index
    %c0_3 = arith.constant 0 : index
    %4 = vector.load %arg5[%c0_2, %c0_3] : memref<1x128xf32, #tpu.memory_space<vmem>>, vector<1x128xf32>
    %c0_4 = arith.constant 0 : index
    %c0_5 = arith.constant 0 : index
    %c0_6 = arith.constant 0 : index
    %5 = vector.load %arg2[%c0_4, %c0_5, %c0_6] : memref<1x64x96xbf16, #tpu.memory_space<vmem>>, vector<1x64x96xbf16>
    %6 = vector.shape_cast %5 : vector<1x64x96xbf16> to vector<64x96xbf16>
    %c0_7 = arith.constant 0 : index
    %c0_8 = arith.constant 0 : index
    %c0_9 = arith.constant 0 : index
    %7 = vector.load %arg3[%c0_7, %c0_8, %c0_9] : memref<1x64x96xbf16, #tpu.memory_space<vmem>>, vector<1x64x96xbf16>
    %8 = vector.shape_cast %7 : vector<1x64x96xbf16> to vector<64x96xbf16>
    %cst = arith.constant dense<0.000000e+00> : vector<64x128xf32>
    %9 = tpu.matmul %6, %3, %cst {dimension_numbers = #tpu.dot_dimension_numbers<[1], [0], [0], [1], [0, 0, 1, 1], [], []>} : vector<64x96xbf16>, vector<96x128xbf16>, vector<64x128xf32> -> vector<64x128xf32>
    %10 = vector.broadcast %4 : vector<1x128xf32> to vector<64x128xf32>
    %11 = arith.addf %9, %10 : vector<64x128xf32>
    %cst_10 = arith.constant 0.000000e+00 : f32
    %12 = vector.broadcast %cst_10 : f32 to vector<64x128xf32>
    %13 = arith.maximumf %11, %12 : vector<64x128xf32>
    %cst_11 = arith.constant dense<0.000000e+00> : vector<64x128xf32>
    %14 = tpu.matmul %8, %3, %cst_11 {dimension_numbers = #tpu.dot_dimension_numbers<[1], [0], [0], [1], [0, 0, 1, 1], [], []>} : vector<64x96xbf16>, vector<96x128xbf16>, vector<64x128xf32> -> vector<64x128xf32>
    %15 = vector.broadcast %4 : vector<1x128xf32> to vector<64x128xf32>
    %16 = arith.addf %14, %15 : vector<64x128xf32>
    %cst_12 = arith.constant 0.000000e+00 : f32
    %17 = vector.broadcast %cst_12 : f32 to vector<64x128xf32>
    %18 = arith.maximumf %16, %17 : vector<64x128xf32>
    %19 = arith.mulf %13, %18 : vector<64x128xf32>
    %c0_13 = arith.constant 0 : index
    %c0_14 = arith.constant 0 : index
    %20 = vector.load %arg8[%c0_13, %c0_14] : memref<1x128xf32, #tpu.memory_space<vmem>>, vector<1x128xf32>
    %cst_15 = arith.constant dense<0.000000e+00> : vector<128xf32>
    %21 = vector.multi_reduction <add>, %19, %cst_15 [0] : vector<64x128xf32> to vector<128xf32>
    %22 = vector.shape_cast %21 : vector<128xf32> to vector<1x128xf32>
    %23 = arith.addf %20, %22 : vector<1x128xf32>
    %c0_16 = arith.constant 0 : index
    %c0_17 = arith.constant 0 : index
    %24 = vector.load %arg8[%c0_16, %c0_17] : memref<1x128xf32, #tpu.memory_space<vmem>>, vector<1x128xf32>
    tpu.vector_store %arg8[%c0_16, %c0_17], %23 {strides = array<i32>} : memref<1x128xf32, #tpu.memory_space<vmem>>, vector<1x128xf32>,
    %c0_i32_18 = arith.constant 0 : i32
    %25 = arith.cmpi eq, %arg1, %c0_i32_18 : i32
    %26 = arith.extui %25 : i1 to i32
    %c0_i32_19 = arith.constant 0 : i32
    %27 = arith.cmpi ne, %26, %c0_i32_19 : i32
    scf.if %27 {
      %c0_20 = arith.constant 0 : index
      %c0_21 = arith.constant 0 : index
      %28 = vector.load %arg8[%c0_20, %c0_21] : memref<1x128xf32, #tpu.memory_space<vmem>>, vector<1x128xf32>
      %cst_22 = arith.constant dense<0.000000e+00> : vector<1xf32>
      %29 = vector.multi_reduction <add>, %28, %cst_22 [1] : vector<1x128xf32> to vector<1xf32>
      %30 = vector.shape_cast %29 : vector<1xf32> to vector<1x1xf32>
      %31 = arith.subf %30, %30 : vector<1x1xf32>
      %32 = math.exp %31 : vector<1x1xf32>
      %cst_23 = arith.constant dense<0.000000e+00> : vector<1xf32>
      %33 = vector.multi_reduction <add>, %32, %cst_23 [1] : vector<1x1xf32> to vector<1xf32>
      %34 = vector.shape_cast %33 : vector<1xf32> to vector<1x1xf32>
      %35 = arith.divf %32, %34 : vector<1x1xf32>
      %36 = vector.shape_cast %35 : vector<1x1xf32> to vector<1x1xf32>
      %37 = vector.broadcast %36 : vector<1x1xf32> to vector<8x128xf32>
      %c0_24 = arith.constant 0 : index
      %c0_25 = arith.constant 0 : index
      %c0_26 = arith.constant 0 : index
      %38 = vector.load %arg6[%c0_24, %c0_25, %c0_26] : memref<1x8x128xf32, #tpu.memory_space<vmem>>, vector<1x8x128xf32>
      %39 = vector.shape_cast %38 : vector<1x8x128xf32> to vector<8x128xf32>
      %40 = vector.shape_cast %37 : vector<8x128xf32> to vector<1x8x128xf32>
      tpu.vector_store %arg6[%c0_24, %c0_25, %c0_26], %40 {strides = array<i32>} : memref<1x8x128xf32, #tpu.memory_space<vmem>>, vector<1x8x128xf32>,
      %41 = vector.shape_cast %30 : vector<1x1xf32> to vector<1x1xf32>
      %42 = vector.broadcast %41 : vector<1x1xf32> to vector<8x128xf32>
      %c0_27 = arith.constant 0 : index
      %c0_28 = arith.constant 0 : index
      %c0_29 = arith.constant 0 : index
      %43 = vector.load %arg7[%c0_27, %c0_28, %c0_29] : memref<1x8x128xf32, #tpu.memory_space<vmem>>, vector<1x8x128xf32>
      %44 = vector.shape_cast %43 : vector<1x8x128xf32> to vector<8x128xf32>
      %45 = vector.shape_cast %42 : vector<8x128xf32> to vector<1x8x128xf32>
      tpu.vector_store %arg7[%c0_27, %c0_28, %c0_29], %45 {strides = array<i32>} : memref<1x8x128xf32, #tpu.memory_space<vmem>>, vector<1x8x128xf32>,
    } else {
    }
    return
  }
  func.func @transform_0(%arg0: i32, %arg1: i32) -> (i32, i32, i32) {
    %c0_i32 = arith.constant 0 : i32
    %c0_i32_0 = arith.constant 0 : i32
    return %arg0, %arg1, %c0_i32 : i32, i32, i32
  }
  func.func @transform_1(%arg0: i32, %arg1: i32) -> (i32, i32, i32) {
    %c0_i32 = arith.constant 0 : i32
    %c0_i32_0 = arith.constant 0 : i32
    return %arg0, %arg1, %c0_i32 : i32, i32, i32
  }
  func.func @transform_2(%arg0: i32, %arg1: i32) -> (i32, i32) {
    %c0_i32 = arith.constant 0 : i32
    %c0_i32_0 = arith.constant 0 : i32
    %c0_i32_1 = arith.constant 0 : i32
    return %c0_i32, %c0_i32_0 : i32, i32
  }
  func.func @transform_3(%arg0: i32, %arg1: i32) -> (i32, i32) {
    %c0_i32 = arith.constant 0 : i32
    %c0_i32_0 = arith.constant 0 : i32
    %c0_i32_1 = arith.constant 0 : i32
    return %c0_i32, %c0_i32_0 : i32, i32
  }
  func.func @transform_4(%arg0: i32, %arg1: i32) -> (i32, i32, i32) {
    %c0_i32 = arith.constant 0 : i32
    %c0_i32_0 = arith.constant 0 : i32
    %c0_i32_1 = arith.constant 0 : i32
    return %arg0, %c0_i32, %c0_i32_0 : i32, i32, i32
  }
  func.func @transform_5(%arg0: i32, %arg1: i32) -> (i32, i32, i32) {
    %c0_i32 = arith.constant 0 : i32
    %c0_i32_0 = arith.constant 0 : i32
    %c0_i32_1 = arith.constant 0 : i32
    return %arg0, %c0_i32, %c0_i32_0 : i32, i32, i32
  }
}

</mosaic_0001>

<llo_original>
// kernel: siamese_cnn3d_forward.1
$region0: #{siamese_cnn3d_forward.1}
  #allocation0 [shape = 'u32[]', space=smem, size = 0x4, offset = 0x4, fixed_abs, tag = 'smem constant byte address 0x4 - core index']
  #allocation1 [shape = 'u32[144,128]{1,0:T(1,128)}', space=vmem, size = 0x12000, scoped, tag = 'internal scratch']
  #allocation2 [shape = 'f32[1,128]{1,0:T(1,128)}', space=vmem, size = 0x200, scoped, tag = 'scratch operand']
  %s0 = inlined_call_operand.vmem [shape: bf16[2,64,96], index: 0, kind: input, shape index: {}]
  %s1 = inlined_call_operand.vmem [shape: bf16[2,64,96], index: 1, kind: input, shape index: {}]
  %s2 = inlined_call_operand.vmem [shape: bf16[96,128], index: 2, kind: input, shape index: {}]
  %s3 = inlined_call_operand.vmem [shape: f32[1,128], index: 3, kind: input, shape index: {}]
  %s4 = inlined_call_operand.vmem [shape: f32[2,8,128], index: 4, kind: output, shape index: {0}]
  %s5 = inlined_call_operand.hbm [shape: f32[2,8,128], index: 5, kind: output, shape index: {1}]
  %6 = xla_tuple %s4, %s5
  %s7 = sld [smem:[#allocation0]]
  $region65: #{siamese_cnn3d_forward.1} parent=0
    _
  %s9 = ssub.s32 1, %s7
  %s10 = scalar_select 0, %s9, %s7
  $region1: #{siamese_cnn3d_forward.1} parent=0
    #allocation3 [shape = 'u8[8192]{0}', space=vmem, size = 0x2000, scoped, tag = 'output window, operand 1']
    #allocation4 [shape = 's32[2]{0}', space=sflag, size = 0x8, scoped, tag = 'scoped memory for siamese_cnn3d_forward.1']
    %11 = vsyncpa [#allocation4], 0
    %s12 = scalar_lea.sflag [#allocation4], 1
    %13 = vsyncpa %s12, 0
    loop: start=0, step=1, limit=4
    $region2: #{siamese_cnn3d_forward.1} parent=1 // loop_pre_header
      _
    $region3: #{siamese_cnn3d_forward.1} parent=1 // loop_header
      %s15 = sphi 0, %s19
      %p16 = scmp.ge.s32.totalorder %s15, 4
      %s22 = sphi 0, %s34
      %s23 = sphi 0, %s30
      %s24 = sphi 0, %s22
      %s25 = sphi 0, %s23
      %s26 = sphi 0, %s24
      %s27 = sphi 0, %s25
      %s39 = sphi 0, %s41
      %s42 = sphi 0, %s39
      %s43 = sphi 0, %s42
      %s59 = sphi 0, %s43
      %s67 = sphi 0, %s69
      %s70 = sphi 0, %s67
      %s71 = sphi 0, %s70
      %s87 = sphi 0, %s71
      %s91 = sphi 0, %s91
      %s93 = sphi 0, %s91
      %s94 = sphi 0, %s93
      %s108 = sphi 0, %s94
      %s112 = sphi 0, %s112
      %s114 = sphi 0, %s112
      %s115 = sphi 0, %s114
      %s129 = sphi 0, %s115
      %s135 = sphi 0, %s137
      %s138 = sphi 0, %s135
      %s139 = sphi 0, %s138
      %s155 = sphi 0, %s139
      %s161 = sphi 0, %s163
      %s164 = sphi 0, %s161
      %s165 = sphi 0, %s164
      %s181 = sphi 0, %s165
    $region4: #{siamese_cnn3d_forward.1} parent=1 // loop_header_branch
      %18 = sbr.rel (%p16) target = $region8
    $region5: #{siamese_cnn3d_forward.1} parent=1 // loop_body
      %s20 = ssub.s32 %s15, 1
      %s21 = ssub.s32 %s15, 2
      %s28 = sadd.s32 1, %s23
      %p29 = scmp.ge.s32.totalorder %s28, 1
      %s30 = scalar_select %p29, 0, %s28
      %s31 = sadd.s32 1, %s22
      %s32 = scalar_select %p29, %s31, %s22
      %p33 = scmp.ge.s32.totalorder %s32, 2
      %s34 = scalar_select %p33, 0, %s32
      %s35 = ssub.s32 %s22, %s34
      %s36 = ssub.s32 %s23, %s30
      %s37 = sor.u32 %s35, %s36
      %p38 = scmp.eq.s32.totalorder %s37, 0
      %s40 = sadd.s32 %s39, 1
      %s41 = scalar_select %p38, %s39, %s40
      %p44 = pneg %p38
      %p45 = scmp.eq.s32.totalorder %s15, 1
      %p46 = por %p44, %p45
      %p47 = scmp.ne.s32.totalorder %s39, %s42
      %p48 = scmp.eq.s32.totalorder %s15, 0
      %p49 = por %p47, %p48
      %p50 = scmp.ne.s32.totalorder %s39, %s42
      %p51 = scmp.eq.s32.totalorder %s20, 1
      %p52 = por %p50, %p51
      %p53 = scmp.ne.s32.totalorder %s42, %s43
      %p54 = scmp.eq.s32.totalorder %s20, 0
      %p55 = por %p53, %p54
      %p56 = scmp.ne.s32.totalorder %s42, %s43
      %p57 = scmp.eq.s32.totalorder %s21, 1
      %p58 = por %p56, %p57
      %p60 = scmp.ne.s32.totalorder %s43, %s59
      %p61 = scmp.eq.s32.totalorder %s21, 0
      %p62 = por %p60, %p61
      %s63 = ssub.s32 %s22, %s34
      %s64 = ssub.s32 %s23, %s30
      %s65 = sor.u32 %s63, %s64
      %p66 = scmp.eq.s32.totalorder %s65, 0
      %s68 = sadd.s32 %s67, 1
      %s69 = scalar_select %p66, %s67, %s68
      %p72 = pneg %p66
      %p73 = scmp.eq.s32.totalorder %s15, 1
      %p74 = por %p72, %p73
      %p75 = scmp.ne.s32.totalorder %s67, %s70
      %p76 = scmp.eq.s32.totalorder %s15, 0
      %p77 = por %p75, %p76
      %p78 = scmp.ne.s32.totalorder %s67, %s70
      %p79 = scmp.eq.s32.totalorder %s20, 1
      %p80 = por %p78, %p79
      %p81 = scmp.ne.s32.totalorder %s70, %s71
      %p82 = scmp.eq.s32.totalorder %s20, 0
      %p83 = por %p81, %p82
      %p84 = scmp.ne.s32.totalorder %s70, %s71
      %p85 = scmp.eq.s32.totalorder %s21, 1
      %p86 = por %p84, %p85
      %p88 = scmp.ne.s32.totalorder %s71, %s87
      %p89 = scmp.eq.s32.totalorder %s21, 0
      %p90 = por %p88, %p89
      %s92 = sadd.s32 %s91, 1
      %p95 = scmp.eq.s32.totalorder %s15, 1
      %p96 = scmp.ne.s32.totalorder %s91, %s93
      %p97 = scmp.eq.s32.totalorder %s15, 0
      %p98 = por %p96, %p97
      %p99 = scmp.ne.s32.totalorder %s91, %s93
      %p100 = scmp.eq.s32.totalorder %s20, 1
      %p101 = por %p99, %p100
      %p102 = scmp.ne.s32.totalorder %s93, %s94
      %p103 = scmp.eq.s32.totalorder %s20, 0
      %p104 = por %p102, %p103
      %p105 = scmp.ne.s32.totalorder %s93, %s94
      %p106 = scmp.eq.s32.totalorder %s21, 1
      %p107 = por %p105, %p106
      %p109 = scmp.ne.s32.totalorder %s94, %s108
      %p110 = scmp.eq.s32.totalorder %s21, 0
      %p111 = por %p109, %p110
      %s113 = sadd.s32 %s112, 1
      %p116 = scmp.eq.s32.totalorder %s15, 1
      %p117 = scmp.ne.s32.totalorder %s112, %s114
      %p118 = scmp.eq.s32.totalorder %s15, 0
      %p119 = por %p117, %p118
      %p120 = scmp.ne.s32.totalorder %s112, %s114
      %p121 = scmp.eq.s32.totalorder %s20, 1
      %p122 = por %p120, %p121
      %p123 = scmp.ne.s32.totalorder %s114, %s115
      %p124 = scmp.eq.s32.totalorder %s20, 0
      %p125 = por %p123, %p124
      %p126 = scmp.ne.s32.totalorder %s114, %s115
      %p127 = scmp.eq.s32.totalorder %s21, 1
      %p128 = por %p126, %p127
      %p130 = scmp.ne.s32.totalorder %s115, %s129
      %p131 = scmp.eq.s32.totalorder %s21, 0
      %p132 = por %p130, %p131
      %s133 = ssub.s32 %s22, %s34
      %p134 = scmp.eq.s32.totalorder %s133, 0
      %s136 = sadd.s32 %s135, 1
      %s137 = scalar_select %p134, %s135, %s136
      %p140 = pneg %p134
      %p141 = scmp.eq.s32.totalorder %s15, 1
      %p142 = por %p140, %p141
      %p143 = scmp.ne.s32.totalorder %s135, %s138
      %p144 = scmp.eq.s32.totalorder %s15, 0
      %p145 = por %p143, %p144
      %p146 = scmp.ne.s32.totalorder %s135, %s138
      %p147 = scmp.eq.s32.totalorder %s20, 1
      %p148 = por %p146, %p147
      %p149 = scmp.ne.s32.totalorder %s138, %s139
      %p150 = scmp.eq.s32.totalorder %s20, 0
      %p151 = por %p149, %p150
      %p152 = scmp.ne.s32.totalorder %s138, %s139
      %p153 = scmp.eq.s32.totalorder %s21, 1
      %p154 = por %p152, %p153
      %p156 = scmp.ne.s32.totalorder %s139, %s155
      %p157 = scmp.eq.s32.totalorder %s21, 0
      %p158 = por %p156, %p157
      %s159 = ssub.s32 %s22, %s34
      %p160 = scmp.eq.s32.totalorder %s159, 0
      %s162 = sadd.s32 %s161, 1
      %s163 = scalar_select %p160, %s161, %s162
      %p166 = pneg %p160
      %p167 = scmp.eq.s32.totalorder %s15, 1
      %p168 = por %p166, %p167
      %p169 = scmp.ne.s32.totalorder %s161, %s164
      %p170 = scmp.eq.s32.totalorder %s15, 0
      %p171 = por %p169, %p170
      %p172 = scmp.ne.s32.totalorder %s161, %s164
      %p173 = scmp.eq.s32.totalorder %s20, 1
      %p174 = por %p172, %p173
      %p175 = scmp.ne.s32.totalorder %s164, %s165
      %p176 = scmp.eq.s32.totalorder %s20, 0
      %p177 = por %p175, %p176
      %p178 = scmp.ne.s32.totalorder %s164, %s165
      %p179 = scmp.eq.s32.totalorder %s21, 1
      %p180 = por %p178, %p179
      %p182 = scmp.ne.s32.totalorder %s165, %s181
      %p183 = scmp.eq.s32.totalorder %s21, 0
      %p184 = por %p182, %p183
      %p185 = scmp.le.s32.totalorder 1, %s15
      %p186 = scmp.lt.s32.totalorder %s15, 3
      %p187 = pnand %p185, %p186
      %p188 = pneg %p187
      // Predicated region
      $region9: #{siamese_cnn3d_forward.1} parent=5 // pred_check
        _
      $region10: #{siamese_cnn3d_forward.1} parent=5 // pred_check_branch
        %190 = sbr.rel (%p187) target = $region12
      $region11: #{siamese_cnn3d_forward.1} parent=5 // pred_region
        %s191 = ssub.s32 %s15, 1
        // Predicated region
        $region13: #{siamese_cnn3d_forward.1} parent=11 // pred_check
          %p192 = pneg %p104
        $region14: #{siamese_cnn3d_forward.1} parent=11 // pred_check_branch
          %194 = sbr.rel (%p192) target = $region16
        $region15: #{siamese_cnn3d_forward.1} parent=11 // pred_region
          _
        $region16: #{siamese_cnn3d_forward.1} parent=11 // pred_fallthru
          _
        // Predicated region
        $region17: #{siamese_cnn3d_forward.1} parent=11 // pred_check
          %p195 = pneg %p125
        $region18: #{siamese_cnn3d_forward.1} parent=11 // pred_check_branch
          %197 = sbr.rel (%p195) target = $region20
        $region19: #{siamese_cnn3d_forward.1} parent=11 // pred_region
          _
        $region20: #{siamese_cnn3d_forward.1} parent=11 // pred_fallthru
          _
      $region12: #{siamese_cnn3d_forward.1} parent=5 // pred_fallthru
        _
      %p198 = scmp.lt.s32.totalorder %s15, 2
      // Predicated region
      $region21: #{siamese_cnn3d_forward.1} parent=5 // pred_check
        %p199 = pneg %p198
      $region22: #{siamese_cnn3d_forward.1} parent=5 // pred_check_branch
        %201 = sbr.rel (%p199) target = $region24
      $region23: #{siamese_cnn3d_forward.1} parent=5 // pred_region
        // Predicated region
        $region25: #{siamese_cnn3d_forward.1} parent=23 // pred_check
          %p202 = pneg %p49
        $region26: #{siamese_cnn3d_forward.1} parent=23 // pred_check_branch
          %204 = sbr.rel (%p202) target = $region28
        $region27: #{siamese_cnn3d_forward.1} parent=23 // pred_region
          %s205 = smul.u32 8, %s23
          %p206 = scmp.lt.s32.totalorder %s22, 1
          %s207 = scalar_select %p206, %s22, 1
          %p208 = scmp.lt.s32.totalorder %s205, 7
          %s209 = scalar_select %p208, %s205, 7
          %s210 = smul.addr %s207, 8
          %s211 = sadd.s32 %s209, %s210
          %s212 = smul.addr %s211, 4
          %s213 = scalar_lea.vmem %s0, %s212
          %s214 = smul.u32 8, %s23
        $region28: #{siamese_cnn3d_forward.1} parent=23 // pred_fallthru
          _
        // Predicated region
        $region29: #{siamese_cnn3d_forward.1} parent=23 // pred_check
          %p215 = pneg %p77
        $region30: #{siamese_cnn3d_forward.1} parent=23 // pred_check_branch
          %217 = sbr.rel (%p215) target = $region32
        $region31: #{siamese_cnn3d_forward.1} parent=23 // pred_region
          %s218 = smul.u32 8, %s23
          %p219 = scmp.lt.s32.totalorder %s22, 1
          %s220 = scalar_select %p219, %s22, 1
          %p221 = scmp.lt.s32.totalorder %s218, 7
          %s222 = scalar_select %p221, %s218, 7
          %s223 = smul.addr %s220, 8
          %s224 = sadd.s32 %s222, %s223
          %s225 = smul.addr %s224, 4
          %s226 = scalar_lea.vmem %s1, %s225
          %s227 = smul.u32 8, %s23
        $region32: #{siamese_cnn3d_forward.1} parent=23 // pred_fallthru
          _
      $region24: #{siamese_cnn3d_forward.1} parent=5 // pred_fallthru
        _
      %p228 = scmp.le.s32.totalorder 1, %s15
      %p229 = scmp.lt.s32.totalorder %s15, 3
      %p230 = pnand %p228, %p229
      %p231 = pneg %p230
      // Predicated region
      $region33: #{siamese_cnn3d_forward.1} parent=5 // pred_check
        _
      $region34: #{siamese_cnn3d_forward.1} parent=5 // pred_check_branch
        %233 = sbr.rel (%p230) target = $region36
      $region35: #{siamese_cnn3d_forward.1} parent=5 // pred_region
        %s234 = ssub.s32 %s15, 1
        %s235 = smul.u32 8, %s25
        %p236 = scmp.lt.s32.totalorder %s24, 1
        %s237 = scalar_select %p236, %s24, 1
        %p238 = scmp.lt.s32.totalorder %s235, 7
        %s239 = scalar_select %p238, %s235, 7
        %s240 = smul.addr %s237, 8
        %s241 = sadd.s32 %s239, %s240
        %s242 = smul.addr %s241, 4
        %s243 = scalar_lea.vmem %s0, %s242
        %p244 = pneg %p55
        %p245 = pneg %p52
        %s246 = smul.u32 8, %s25
        %p247 = scmp.lt.s32.totalorder %s24, 1
        %s248 = scalar_select %p247, %s24, 1
        %p249 = scmp.lt.s32.totalorder %s246, 7
        %s250 = scalar_select %p249, %s246, 7
        %s251 = smul.addr %s248, 8
        %s252 = sadd.s32 %s250, %s251
        %s253 = smul.addr %s252, 4
        %s254 = scalar_lea.vmem %s1, %s253
        %p255 = pneg %p83
        %p256 = pneg %p80
        %p257 = pneg %p104
        %p258 = pneg %p101
        %p259 = pneg %p125
        %p260 = pneg %p122
        %p261 = pneg %p151
        %p262 = pneg %p148
        %p263 = scmp.lt.s32.totalorder %s24, 1
        %s264 = scalar_select %p263, %s24, 1
        %s265 = smul.addr %s264, 8
        %s266 = scalar_lea.vmem %s4, %s265
        %p267 = pneg %p177
        %p268 = pneg %p174
        %s269 = sand.u32 %s164, 1
        %s270 = scalar_lea.sflag [#allocation4], %s269
        %s271 = sand.u32 %s164, 1
        %s272 = smul.addr %s271, 8
        %s273 = scalar_lea.vmem [#allocation3], %s272
        %s274 = smul.u32 8, %s25
        %p275 = scmp.lt.s32.totalorder %s24, 1
        %s276 = scalar_select %p275, %s24, 1
        %p277 = scmp.lt.s32.totalorder %s274, 7
        %s278 = scalar_select %p277, %s274, 7
        %s279 = smul.addr %s276, 8
        %s280 = sadd.s32 %s278, %s279
        %s281 = smul.addr %s280, 4
        %s282 = scalar_lea.vmem %s0, %s281
        %s283 = smul.u32 8, %s25
        %s284 = smul.u32 8, %s25
        %p285 = scmp.lt.s32.totalorder %s24, 1
        %s286 = scalar_select %p285, %s24, 1
        %p287 = scmp.lt.s32.totalorder %s284, 7
        %s288 = scalar_select %p287, %s284, 7
        %s289 = smul.addr %s286, 8
        %s290 = sadd.s32 %s288, %s289
        %s291 = smul.addr %s290, 4
        %s292 = scalar_lea.vmem %s1, %s291
        %s293 = smul.u32 8, %s25
        %p294 = scmp.lt.s32.totalorder %s24, 1
        %s295 = scalar_select %p294, %s24, 1
        %s296 = smul.addr %s295, 8
        %s297 = scalar_lea.vmem %s4, %s296
        %p299 = scmp.eq.s32.totalorder %s25, 0
        // Predicated region
        $region37: #{siamese_cnn3d_forward.1} parent=35 // pred_check
          %p300 = pneg %p299
        $region38: #{siamese_cnn3d_forward.1} parent=35 // pred_check_branch
          %302 = sbr.rel (%p300) target = $region40
        $region39: #{siamese_cnn3d_forward.1} parent=35 // pred_region
          %303 = vst [vmem:[#allocation2] sm:$0x1] 0.0
        $region40: #{siamese_cnn3d_forward.1} parent=35 // pred_fallthru
          _
        %v304 = vld [vmem:[%s2] sm:$0xf]
        %v305 = vld [vmem:[%s2 + $0x4] sm:$0xf]
        %v306 = vld [vmem:[%s2 + $0x8] sm:$0xf]
        %v307 = vld [vmem:[%s2 + $0xc] sm:$0xf]
        %v308 = vld [vmem:[%s2 + $0x10] sm:$0xf]
        %v309 = vld [vmem:[%s2 + $0x14] sm:$0xf]
        %v310 = vld [vmem:[%s2 + $0x18] sm:$0xf]
        %v311 = vld [vmem:[%s2 + $0x1c] sm:$0xf]
        %v312 = vld [vmem:[%s2 + $0x20] sm:$0xf]
        %v313 = vld [vmem:[%s2 + $0x24] sm:$0xf]
        %v314 = vld [vmem:[%s2 + $0x28] sm:$0xf]
        %v315 = vld [vmem:[%s2 + $0x2c] sm:$0xf]
        %v316 = vld [vmem:[%s3] sm:$0x1]
        %v317 = vld [vmem:[%s282] sm:$0xf]
        %v318 = vld [vmem:[%s282 + $0x4] sm:$0xf]
        %v319 = vld [vmem:[%s282 + $0x8] sm:$0xf]
        %v320 = vld [vmem:[%s282 + $0xc] sm:$0xf]
        %v321 = vld [vmem:[%s282 + $0x10] sm:$0xf]
        %v322 = vld [vmem:[%s282 + $0x14] sm:$0xf]
        %v323 = vld [vmem:[%s282 + $0x18] sm:$0xf]
        %v324 = vld [vmem:[%s282 + $0x1c] sm:$0xf]
        %v325 = vld [vmem:[%s292] sm:$0xf]
        %v326 = vld [vmem:[%s292 + $0x4] sm:$0xf]
        %v327 = vld [vmem:[%s292 + $0x8] sm:$0xf]
        %v328 = vld [vmem:[%s292 + $0xc] sm:$0xf]
        %v329 = vld [vmem:[%s292 + $0x10] sm:$0xf]
        %v330 = vld [vmem:[%s292 + $0x14] sm:$0xf]
        %v331 = vld [vmem:[%s292 + $0x18] sm:$0xf]
        %v332 = vld [vmem:[%s292 + $0x1c] sm:$0xf]
        %v334 = vlaneseq
        %v335 = vshrl.u32 %v334, 7
        %v336 = vsub.s32 0, %v335
        %v337 = vrot.slane %v316, %v336
        %v347 = vunpack.c.l.b16 %v317
        %v348 = vunpack.c.l.b16 %v318
        %v349 = vunpack.c.l.b16 %v319
        %v350 = vunpack.c.l.b16 %v320
        %v351 = vunpack.c.l.b16 %v321
        %v352 = vunpack.c.l.b16 %v322
        %v353 = vunpack.c.l.b16 %v323
        %v354 = vunpack.c.l.b16 %v324
        %v355 = vpack.c.b16 %v348, %v347
        %v356 = vpack.c.b16 %v350, %v349
        %v357 = vpack.c.b16 %v352, %v351
        %v358 = vpack.c.b16 %v354, %v353
        %v371 = vunpack.c.l.b16 %v304
        %v372 = vunpack.c.l.b16 %v305
        %v373 = vunpack.c.l.b16 %v306
        %v374 = vunpack.c.l.b16 %v307
        %v375 = vunpack.c.l.b16 %v308
        %v376 = vunpack.c.l.b16 %v309
        %v377 = vunpack.c.l.b16 %v310
        %v378 = vunpack.c.l.b16 %v311
        %v379 = vunpack.c.l.b16 %v312
        %v380 = vunpack.c.l.b16 %v313
        %v381 = vunpack.c.l.b16 %v314
        %v382 = vunpack.c.l.b16 %v315
        %v383 = vpack.c.b16 %v372, %v371
        %v384 = vpack.c.b16 %v374, %v373
        %v385 = vpack.c.b16 %v376, %v375
        %v386 = vpack.c.b16 %v378, %v377
        %v387 = vpack.c.b16 %v380, %v379
        %v388 = vpack.c.b16 %v382, %v381
        %vm395 = vcmask 785408
        %v397 = vsel %vm395, %v355, 0
        %v400 = vsel %vm395, %v356, 0
        %v403 = vsel %vm395, %v357, 0
        %v406 = vsel %vm395, %v358, 0
        %408 = vmatprep.subr.bf16.mxu0 0
        %409 = vmatpush1.bf16.msra.mxu0 %v383
        %410 = vmatprep.subr.bf16.mxu0 0
        %411 = vmatpush1.bf16.msra.mxu0 %v384
        %412 = vmatprep.subr.bf16.mxu0 0
        %413 = vmatpush1.bf16.msra.mxu0 %v385
        %414 = vmatprep.subr.bf16.mxu0 0
        %415 = vmatpush1.bf16.msra.mxu0 %v386
        %416 = vmatprep.subr.bf16.mxu0 0
        %417 = vmatpush1.bf16.msra.mxu0 %v387
        %418 = vmatprep.subr.bf16.mxu0 0
        %419 = vmatpush1.bf16.msra.mxu0 %v388
        %420 = vmatprep.subr.bf16.mxu0 0
        %421 = vmatpush1.bf16.msra.mxu0 0
        %422 = vmatprep.subr.bf16.mxu0 0
        %423 = vmatpush1.bf16.msra.mxu0 0
        %424 = vmatprep.subr.bf16.mxu0 0
        %425 = vmatpush1.bf16.msra.mxu0 0
        %426 = vmatprep.subr.bf16.mxu0 0
        %427 = vmatpush1.bf16.msra.mxu0 0
        %428 = vmatprep.subr.bf16.mxu0 0
        %429 = vmatpush1.bf16.msra.mxu0 0
        %430 = vmatprep.subr.bf16.mxu0 0
        %431 = vmatpush1.bf16.msra.mxu0 0
        %432 = vmatprep.subr.bf16.mxu0 0
        %433 = vmatpush1.bf16.msra.mxu0 0
        %434 = vmatprep.subr.bf16.mxu0 0
        %435 = vmatpush1.bf16.msra.mxu0 0
        %436 = vmatprep.subr.bf16.mxu0 0
        %437 = vmatpush1.bf16.msra.mxu0 0
        %438 = vmatprep.subr.bf16.mxu0 0
        %439 = vmatpush1.bf16.msra.mxu0 0
        %440 = vmatprep.mubr.bf16.mxu0 0
        %441 = vmatmul.mubr.bf16.gmra.mrb[0].mxu0 %v397
        %v442 = vpop.f32.mrb[0].mxu0
        %v443 = vadd.f32 %v337, %v442
        %v444 = vpop.f32.mrb[0].mxu0
        %v445 = vpop.f32.mrb[0].mxu0
        %v446 = vadd.f32 %v337, %v445
        %v447 = vpop.f32.mrb[0].mxu0
        %448 = vmatprep.mubr.bf16.mxu0 0
        %449 = vmatmul.mubr.bf16.gmra.mrb[0].mxu0 %v400
        %v450 = vpop.f32.mrb[0].mxu0
        %v451 = vadd.f32 %v337, %v450
        %v452 = vpop.f32.mrb[0].mxu0
        %v453 = vpop.f32.mrb[0].mxu0
        %v454 = vadd.f32 %v337, %v453
        %v455 = vpop.f32.mrb[0].mxu0
        %456 = vmatprep.mubr.bf16.mxu0 0
        %457 = vmatmul.mubr.bf16.gmra.mrb[0].mxu0 %v403
        %v458 = vpop.f32.mrb[0].mxu0
        %v459 = vadd.f32 %v337, %v458
        %v460 = vpop.f32.mrb[0].mxu0
        %v461 = vpop.f32.mrb[0].mxu0
        %v462 = vadd.f32 %v337, %v461
        %v463 = vpop.f32.mrb[0].mxu0
        %464 = vmatprep.mubr.bf16.mxu0 0
        %465 = vmatmul.mubr.bf16.gmra.mrb[0].mxu0 %v406
        %v466 = vpop.f32.mrb[0].mxu0
        %v467 = vadd.f32 %v337, %v466
        %v468 = vpop.f32.mrb[0].mxu0
        %v469 = vpop.f32.mrb[0].mxu0
        %v470 = vadd.f32 %v337, %v469
        %v471 = vpop.f32.mrb[0].mxu0
        %472 = vdwg.mxu0
        %v473 = vmax.f32 %v443, 0.0
        %v474 = vmax.f32 %v446, 0.0
        %v475 = vmax.f32 %v451, 0.0
        %v476 = vmax.f32 %v454, 0.0
        %v477 = vmax.f32 %v459, 0.0
        %v478 = vmax.f32 %v462, 0.0
        %v479 = vmax.f32 %v467, 0.0
        %v480 = vmax.f32 %v470, 0.0
        %v489 = vunpack.c.l.b16 %v325
        %v490 = vunpack.c.l.b16 %v326
        %v491 = vunpack.c.l.b16 %v327
        %v492 = vunpack.c.l.b16 %v328
        %v493 = vunpack.c.l.b16 %v329
        %v494 = vunpack.c.l.b16 %v330
        %v495 = vunpack.c.l.b16 %v331
        %v496 = vunpack.c.l.b16 %v332
        %v497 = vpack.c.b16 %v490, %v489
        %v498 = vpack.c.b16 %v492, %v491
        %v499 = vpack.c.b16 %v494, %v493
        %v500 = vpack.c.b16 %v496, %v495
        %v502 = vsel %vm395, %v497, 0
        %v505 = vsel %vm395, %v498, 0
        %v508 = vsel %vm395, %v499, 0
        %v511 = vsel %vm395, %v500, 0
        %513 = vmatprep.subr.bf16.mxu0 0
        %514 = vmatpush1.bf16.msra.mxu0 %v383
        %515 = vmatprep.subr.bf16.mxu0 0
        %516 = vmatpush1.bf16.msra.mxu0 %v384
        %517 = vmatprep.subr.bf16.mxu0 0
        %518 = vmatpush1.bf16.msra.mxu0 %v385
        %519 = vmatprep.subr.bf16.mxu0 0
        %520 = vmatpush1.bf16.msra.mxu0 %v386
        %521 = vmatprep.subr.bf16.mxu0 0
        %522 = vmatpush1.bf16.msra.mxu0 %v387
        %523 = vmatprep.subr.bf16.mxu0 0
        %524 = vmatpush1.bf16.msra.mxu0 %v388
        %525 = vmatprep.subr.bf16.mxu0 0
        %526 = vmatpush1.bf16.msra.mxu0 0
        %527 = vmatprep.subr.bf16.mxu0 0
        %528 = vmatpush1.bf16.msra.mxu0 0
        %529 = vmatprep.subr.bf16.mxu0 0
        %530 = vmatpush1.bf16.msra.mxu0 0
        %531 = vmatprep.subr.bf16.mxu0 0
        %532 = vmatpush1.bf16.msra.mxu0 0
        %533 = vmatprep.subr.bf16.mxu0 0
        %534 = vmatpush1.bf16.msra.mxu0 0
        %535 = vmatprep.subr.bf16.mxu0 0
        %536 = vmatpush1.bf16.msra.mxu0 0
        %537 = vmatprep.subr.bf16.mxu0 0
        %538 = vmatpush1.bf16.msra.mxu0 0
        %539 = vmatprep.subr.bf16.mxu0 0
        %540 = vmatpush1.bf16.msra.mxu0 0
        %541 = vmatprep.subr.bf16.mxu0 0
        %542 = vmatpush1.bf16.msra.mxu0 0
        %543 = vmatprep.subr.bf16.mxu0 0
        %544 = vmatpush1.bf16.msra.mxu0 0
        %545 = vmatprep.mubr.bf16.mxu0 0
        %546 = vmatmul.mubr.bf16.gmra.mrb[0].mxu0 %v502
        %v547 = vpop.f32.mrb[0].mxu0
        %v548 = vadd.f32 %v337, %v547
        %v549 = vpop.f32.mrb[0].mxu0
        %v550 = vpop.f32.mrb[0].mxu0
        %v551 = vadd.f32 %v337, %v550
        %v552 = vpop.f32.mrb[0].mxu0
        %553 = vmatprep.mubr.bf16.mxu0 0
        %554 = vmatmul.mubr.bf16.gmra.mrb[0].mxu0 %v505
        %v555 = vpop.f32.mrb[0].mxu0
        %v556 = vadd.f32 %v337, %v555
        %v557 = vpop.f32.mrb[0].mxu0
        %v558 = vpop.f32.mrb[0].mxu0
        %v559 = vadd.f32 %v337, %v558
        %v560 = vpop.f32.mrb[0].mxu0
        %561 = vmatprep.mubr.bf16.mxu0 0
        %562 = vmatmul.mubr.bf16.gmra.mrb[0].mxu0 %v508
        %v563 = vpop.f32.mrb[0].mxu0
        %v564 = vadd.f32 %v337, %v563
        %v565 = vpop.f32.mrb[0].mxu0
        %v566 = vpop.f32.mrb[0].mxu0
        %v567 = vadd.f32 %v337, %v566
        %v568 = vpop.f32.mrb[0].mxu0
        %569 = vmatprep.mubr.bf16.mxu0 0
        %570 = vmatmul.mubr.bf16.gmra.mrb[0].mxu0 %v511
        %v571 = vpop.f32.mrb[0].mxu0
        %v572 = vadd.f32 %v337, %v571
        %v573 = vpop.f32.mrb[0].mxu0
        %v574 = vpop.f32.mrb[0].mxu0
        %v575 = vadd.f32 %v337, %v574
        %v576 = vpop.f32.mrb[0].mxu0
        %577 = vdwg.mxu0
        %v578 = vmax.f32 %v548, 0.0
        %v579 = vmax.f32 %v551, 0.0
        %v580 = vmax.f32 %v556, 0.0
        %v581 = vmax.f32 %v559, 0.0
        %v582 = vmax.f32 %v564, 0.0
        %v583 = vmax.f32 %v567, 0.0
        %v584 = vmax.f32 %v572, 0.0
        %v585 = vmax.f32 %v575, 0.0
        %v586 = vmul.f32 %v473, %v578
        %v587 = vmul.f32 %v474, %v579
        %v588 = vmul.f32 %v475, %v580
        %v589 = vmul.f32 %v476, %v581
        %v590 = vmul.f32 %v477, %v582
        %v591 = vmul.f32 %v478, %v583
        %v592 = vmul.f32 %v479, %v584
        %v593 = vmul.f32 %v480, %v585
        %v594 = vld [vmem:[#allocation2] sm:$0x1]
        %v595 = vadd.f32 %v586, %v587
        %v596 = vadd.f32 %v595, %v588
        %v597 = vadd.f32 %v596, %v589
        %v598 = vadd.f32 %v597, %v590
        %v599 = vadd.f32 %v598, %v591
        %v600 = vadd.f32 %v599, %v592
        %v601 = vadd.f32 %v600, %v593
        %v602 = vrot.slane %v601, 4
        %v603 = vadd.f32 %v601, %v602
        %v604 = vrot.slane %v603, 2
        %v605 = vadd.f32 %v603, %v604
        %v606 = vrot.slane %v605, 1
        %v607 = vadd.f32 %v605, %v606
        %v608 = vadd.f32 %v594, %v607
        %609 = vst [vmem:[#allocation2] sm:$0x1] %v608
        // Predicated region
        $region41: #{siamese_cnn3d_forward.1} parent=35 // pred_check
          %p610 = pneg %p299
        $region42: #{siamese_cnn3d_forward.1} parent=35 // pred_check_branch
          %612 = sbr.rel (%p610) target = $region44
        $region43: #{siamese_cnn3d_forward.1} parent=35 // pred_region
          %v613 = vld [vmem:[#allocation2] sm:$0x1]
          %vm614 = vcmask 1040384
          %v615 = vsel %vm614, %v613, 0.0
          %616 = vadd.xlane.f32.xlu0 %v615
          %v617 = vpop.xlane.xlu0 %616
          %v618 = vsub.f32 %v617, %v617
          %v619 = vmul.f32 %v618, 1.442695
          %v620 = vpow.pop %v619
          %v621 = vadd.f32 %v620, 0.0
          %v622 = vrcp.pop %v621
          %v623 = vmul.f32 %v620, %v622
          %v624 = vlaneseq
          %v625 = vshrl.u32 %v624, 7
          %v626 = vsub.s32 0, %v625
          %v627 = vrot.slane %v623, %v626
          %628 = vst [vmem:[%s297] sm:$0xff] %v627
          %v629 = vlaneseq
          %v630 = vshrl.u32 %v629, 7
          %v631 = vsub.s32 0, %v630
          %v632 = vrot.slane %v617, %v631
          %633 = vst [vmem:[%s273] sm:$0xff] %v632
        $region44: #{siamese_cnn3d_forward.1} parent=35 // pred_fallthru
          _
        %p634 = scmp.lt.s32.totalorder %s24, 1
        %s635 = scalar_select %p634, %s24, 1
        %s636 = smul.addr %s635, 8
        %s637 = scalar_lea.vmem %s4, %s636
        %s638 = sand.u32 %s164, 1
        %s639 = scalar_lea.sflag [#allocation4], %s638
        %s640 = sand.u32 %s164, 1
        %s641 = smul.addr %s640, 8
        %s642 = scalar_lea.vmem [#allocation3], %s641
        // Predicated region
        $region45: #{siamese_cnn3d_forward.1} parent=35 // pred_check
          %p643 = pneg %p148
        $region46: #{siamese_cnn3d_forward.1} parent=35 // pred_check_branch
          %645 = sbr.rel (%p643) target = $region48
        $region47: #{siamese_cnn3d_forward.1} parent=35 // pred_region
          _
        $region48: #{siamese_cnn3d_forward.1} parent=35 // pred_fallthru
          _
        // Predicated region
        $region49: #{siamese_cnn3d_forward.1} parent=35 // pred_check
          %p646 = pneg %p174
        $region50: #{siamese_cnn3d_forward.1} parent=35 // pred_check_branch
          %648 = sbr.rel (%p646) target = $region52
        $region51: #{siamese_cnn3d_forward.1} parent=35 // pred_region
          %s650 = ssub.s32 128, 128
          %651 = vsyncadd %s639, %s650
          %s652 = smul.addr %s24, 128
          %s653 = scalar_lea.hbm %s5, %s652
          %s655 = sshll.u32 %s642, 4
          %s656 = int_to_ptr.vmem [resolvable:$true] %s655
          %658 = dma.vmem_to_hbm [thread:$0]  %s656, 128, %s653, %s639
        $region52: #{siamese_cnn3d_forward.1} parent=35 // pred_fallthru
          _
      $region36: #{siamese_cnn3d_forward.1} parent=5 // pred_fallthru
        _
      %p659 = scmp.le.s32.totalorder 2, %s15
      // Predicated region
      $region53: #{siamese_cnn3d_forward.1} parent=5 // pred_check
        %p660 = pneg %p659
      $region54: #{siamese_cnn3d_forward.1} parent=5 // pred_check_branch
        %662 = sbr.rel (%p660) target = $region56
      $region55: #{siamese_cnn3d_forward.1} parent=5 // pred_region
        %s663 = ssub.s32 %s15, 2
        // Predicated region
        $region57: #{siamese_cnn3d_forward.1} parent=55 // pred_check
          %p664 = pneg %p154
        $region58: #{siamese_cnn3d_forward.1} parent=55 // pred_check_branch
          %666 = sbr.rel (%p664) target = $region60
        $region59: #{siamese_cnn3d_forward.1} parent=55 // pred_region
          %p667 = scmp.lt.s32.totalorder %s26, 1
          %s668 = scalar_select %p667, %s26, 1
          %s669 = smul.addr %s668, 8
          %s670 = scalar_lea.vmem %s4, %s669
        $region60: #{siamese_cnn3d_forward.1} parent=55 // pred_fallthru
          _
        // Predicated region
        $region61: #{siamese_cnn3d_forward.1} parent=55 // pred_check
          %p671 = pneg %p180
        $region62: #{siamese_cnn3d_forward.1} parent=55 // pred_check_branch
          %673 = sbr.rel (%p671) target = $region64
        $region63: #{siamese_cnn3d_forward.1} parent=55 // pred_region
          %s674 = sand.u32 %s165, 1
          %s675 = scalar_lea.sflag [#allocation4], %s674
          %s676 = sand.u32 %s165, 1
          %s677 = smul.addr %s676, 8
          %s678 = scalar_lea.vmem [#allocation3], %s677
          %679 = dma.done %s675, 128
        $region64: #{siamese_cnn3d_forward.1} parent=55 // pred_fallthru
          _
      $region56: #{siamese_cnn3d_forward.1} parent=5 // pred_fallthru
        _
    $region6: #{siamese_cnn3d_forward.1} parent=1 // loop_footer
      %s19 = sadd.s32 1, %s15
    $region7: #{siamese_cnn3d_forward.1} parent=1 // loop_footer_branch
      %14 = sbr.rel target = $region3
    $region8: #{siamese_cnn3d_forward.1} parent=1 // loop_exit
      _
    %680 = vsyncpa [#allocation4], 1
    %s681 = scalar_lea.sflag [#allocation4], 1
    %682 = vsyncpa %s681, 1

</llo_original>
